<compile_context>
chip_gen: v7x
topology: tpu7x:2x2x1
jax: 0.10.0
libtpu: 0.0.40
codegen_flags: <defaults>
</compile_context>

<pallas_src>
import functools

import jax
import jax.numpy as jnp
import numpy as np
from jax import lax
from jax.experimental import pallas as pl
from jax.experimental.pallas import tpu as pltpu

LANES = 128
_SUBLANES = {4: 8, 2: 16, 1: 32}   # packed sublane multiple per itemsize


def _loss_partial_kernel(x_ref, acc_ref, *, c, tr, tiles_per_core,
                         mask_from, data_rows, last_lanes,
                         needs_full, needs_tail):
    """Accumulate per-core partial sums of (x-c)^2 and (x+c)^2.

    x_ref   : VMEM tile (tr, 128), input dtype (cast to f32 in-kernel)
    acc_ref : VMEM output block (1, 2, 8, 128) f32 -- the accumulator
              (constant along the inner 'arbitrary' grid axis).
    """
    j = pl.program_id(0)                 # core / split index    ("parallel")
    i = pl.program_id(1)                 # tile within the split ("arbitrary")
    tile_idx = j * tiles_per_core + i    # logical tile index

    @pl.when(i == 0)
    def _init():
        acc_ref[...] = jnp.zeros_like(acc_ref)

    # Single load + in-VMEM upcast; both shifted squares come from the same
    # vregs.  reshape below is a pure sublane regroup (no VMEM copy).
    x = x_ref[...].astype(jnp.float32)
    xm = x - c
    xp = x + c
    sq1 = xm * xm
    sq2 = xp * xp

    def _fold(v):                        # (tr,128) -> (8,128), VPU adds only
        return jnp.sum(v.reshape(tr // 8, 8, LANES), axis=0)

    def _accum(m1, m2):
        acc_ref[0, 0] += _fold(m1)
        acc_ref[0, 1] += _fold(m2)

    if not needs_tail:
        # Statically known: every position of every tile is real data.
        _accum(sq1, sq2)
    else:
        if needs_full:
            @pl.when(tile_idx < mask_from)
            def _full_tile():
                _accum(sq1, sq2)

        @pl.when(tile_idx >= mask_from)
        def _tail_tile():
            # Element (row, lane) is real data iff its flat index < n, i.e.
            # row < data_rows-1, or row == data_rows-1 and lane < last_lanes.
            # Covers lane padding, partial-tile OOB garbage and excess tiles.
            row = (lax.broadcasted_iota(jnp.int32, (tr, LANES), 0)
                   + tile_idx * tr)
            lane = lax.broadcasted_iota(jnp.int32, (tr, LANES), 1)
            valid = jnp.logical_or(
                row < data_rows - 1,
                jnp.logical_and(row == data_rows - 1, lane < last_lanes))
            _accum(jnp.where(valid, sq1, 0.0), jnp.where(valid, sq2, 0.0))


def loss_forward(x, *, tile_rows=8192):
    """Pallas equivalent of Loss.forward. Returns float32 array of shape (2, 1)."""
    d = x.shape[1]
    c = float(1.0 / np.sqrt(np.float32(d)))
    n = int(np.prod(x.shape))

    sub = _SUBLANES.get(jnp.dtype(x.dtype).itemsize, 8)

    data_rows = -(-n // LANES)                       # rows holding real data
    arr_rows = -(-data_rows // sub) * sub            # rows after minimal pad
    flat = x.reshape(-1)
    pad = arr_rows * LANES - n
    if pad:                                          # tiny; aligned case is free
        flat = jnp.pad(flat, (0, pad))
    x2d = flat.reshape(arr_rows, LANES)

    # Tile rows: as large as possible (<= tile_rows), multiple of the packed
    # sublane tile.  Default 8192 -> 4 MiB f32 block, double-buffered.
    tr = max(sub, min((tile_rows // sub) * sub, arr_rows))
    n_tiles = pl.cdiv(arr_rows, tr)

    # 2-way split over a leading 'parallel' axis (v7x dual TensorCore);
    # sequential (and essentially free) on single-core generations.
    nsplit = 2 if n_tiles >= 8 else 1
    tiles_per_core = pl.cdiv(n_tiles, nsplit)
    total_tiles = nsplit * tiles_per_core            # incl. possible excess tile

    last_lanes = n - (data_rows - 1) * LANES         # valid lanes in last data row
    fully_valid_rows = data_rows if last_lanes == LANES else data_rows - 1
    mask_from = fully_valid_rows // tr               # first tile needing a mask
    needs_tail = mask_from < total_tiles
    needs_full = mask_from > 0

    def in_index(j, i):
        t = j * tiles_per_core + i
        # Clamp so an excess (beyond-the-data) grid step re-reads the last real
        # tile; its contribution is fully masked out in the kernel.
        return (jnp.minimum(t, n_tiles - 1), 0)

    kernel = functools.partial(
        _loss_partial_kernel, c=c, tr=tr, tiles_per_core=tiles_per_core,
        mask_from=mask_from, data_rows=data_rows, last_lanes=last_lanes,
        needs_full=needs_full, needs_tail=needs_tail)

    partial = pl.pallas_call(
        kernel,
        out_shape=jax.ShapeDtypeStruct((nsplit, 2, 8, LANES), jnp.float32),
        grid_spec=pltpu.PrefetchScalarGridSpec(
            num_scalar_prefetch=0,
            grid=(nsplit, tiles_per_core),
            in_specs=[pl.BlockSpec((tr, LANES), in_index)],
            out_specs=pl.BlockSpec((1, 2, 8, LANES),
                                   lambda j, i: (j, 0, 0, 0)),
        ),
        compiler_params=pltpu.CompilerParams(
            dimension_semantics=("parallel", "arbitrary"),
            vmem_limit_bytes=32 * 1024 * 1024),
    )(x2d)

    # Tiny epilogue on a few KiB: combine per-core vreg partials, finalize.
    sq = jnp.sum(partial, axis=(0, 2, 3))            # -> (2,)
    losses = 1.0 - jnp.exp(-jnp.sqrt(sq))
    return losses.reshape(2, 1)


def loss_reference(x):
    """Pure-JAX reference matching the PyTorch module."""
    d = jnp.float32(x.shape[1])
    c = 1.0 / jnp.sqrt(d)
    xf = x.astype(jnp.float32)
    l1 = 1.0 - jnp.exp(-jnp.sqrt(jnp.sum((xf - c) ** 2)))
    l2 = 1.0 - jnp.exp(-jnp.sqrt(jnp.sum((xf + c) ** 2)))
    return jnp.stack([l1.reshape(-1), l2.reshape(-1)], axis=0)


if __name__ == "__main__":
    key = jax.random.PRNGKey(0)
    k1, k2, k3 = jax.random.split(key, 3)

    # Main case from the module: NCHW batch, lane-aligned (2048 elements).
    x = jax.random.normal(k1, (2, 4, 16, 16), dtype=jnp.float32)
    out = jax.block_until_ready(loss_forward(x))
    ref = jax.block_until_ready(loss_reference(x))
    assert out.shape == (2, 1), out.shape
    np.testing.assert_allclose(np.asarray(out), np.asarray(ref),
                               rtol=1e-5, atol=1e-5)

    # Ragged tail + mask path (n = 16, not a multiple of 128), non-saturated loss.
    x_small = 0.5 + 0.01 * jax.random.normal(k2, (1, 4, 2, 2), dtype=jnp.float32)
    np.testing.assert_allclose(np.asarray(loss_forward(x_small)),
                               np.asarray(loss_reference(x_small)),
                               rtol=1e-5, atol=1e-5)

    # Multi-tile + 2-way parallel split path (small tile override), near the
    # loss-1 minimum (regime where the old S1/S2 algebra lost precision).
    x_big = 0.5 + 1e-3 * jax.random.normal(k3, (4, 4, 64, 128), dtype=jnp.float32)
    np.testing.assert_allclose(np.asarray(loss_forward(x_big, tile_rows=64)),
                               np.asarray(loss_reference(x_big)),
                               rtol=1e-5, atol=1e-5)

    print("KERNEL_OK")
</pallas_src>

<mosaic_0001>
module attributes {stable_mosaic.version = 11 : i64} {
  func.func @_loss_partial_kernel(%arg0: i32, %arg1: i32, %arg2: memref<16x128xf32, #tpu.memory_space<vmem>>, %arg3: memref<1x2x8x128xf32, #tpu.memory_space<vmem>>) attributes {dimension_semantics = [#tpu.dimension_semantics<parallel>, #tpu.dimension_semantics<arbitrary>], iteration_bounds = array<i64: 1, 1>, scalar_prefetch = 0 : i64, scratch_operands = 0 : i64, tpu.core_type = #tpu.core_type<tc>, window_params = [{transform_indices = @transform_0, window_bounds = array<i64: 16, 128>}, {transform_indices = @transform_1, window_bounds = array<i64: 1, 2, 8, 128>}]} {
    %c0_i32 = arith.constant 0 : i32
    %0 = arith.cmpi eq, %arg1, %c0_i32 : i32
    %1 = arith.extui %0 : i1 to i32
    %c0_i32_0 = arith.constant 0 : i32
    %2 = arith.cmpi ne, %1, %c0_i32_0 : i32
    scf.if %2 {
      %cst_20 = arith.constant 0.000000e+00 : f32
      %26 = vector.broadcast %cst_20 : f32 to vector<1x2x8x128xf32>
      %c0_21 = arith.constant 0 : index
      %c0_22 = arith.constant 0 : index
      %c0_23 = arith.constant 0 : index
      %c0_24 = arith.constant 0 : index
      %27 = vector.load %arg3[%c0_21, %c0_22, %c0_23, %c0_24] : memref<1x2x8x128xf32, #tpu.memory_space<vmem>>, vector<1x2x8x128xf32>
      tpu.vector_store %arg3[%c0_21, %c0_22, %c0_23, %c0_24], %26 {strides = array<i32>} : memref<1x2x8x128xf32, #tpu.memory_space<vmem>>, vector<1x2x8x128xf32>,
    } else {
    }
    %c0 = arith.constant 0 : index
    %c0_1 = arith.constant 0 : index
    %3 = vector.load %arg2[%c0, %c0_1] : memref<16x128xf32, #tpu.memory_space<vmem>>, vector<16x128xf32>
    %cst = arith.constant 5.000000e-01 : f32
    %4 = vector.broadcast %cst : f32 to vector<16x128xf32>
    %5 = arith.subf %3, %4 : vector<16x128xf32>
    %cst_2 = arith.constant 5.000000e-01 : f32
    %6 = vector.broadcast %cst_2 : f32 to vector<16x128xf32>
    %7 = arith.addf %3, %6 : vector<16x128xf32>
    %8 = arith.mulf %5, %5 : vector<16x128xf32>
    %9 = arith.mulf %7, %7 : vector<16x128xf32>
    %c0_3 = arith.constant 0 : index
    %c0_4 = arith.constant 0 : index
    %c0_5 = arith.constant 0 : index
    %c0_6 = arith.constant 0 : index
    %10 = vector.load %arg3[%c0_3, %c0_4, %c0_5, %c0_6] : memref<1x2x8x128xf32, #tpu.memory_space<vmem>>, vector<1x1x8x128xf32>
    %11 = vector.shape_cast %10 : vector<1x1x8x128xf32> to vector<8x128xf32>
    %12 = vector.shape_cast %8 : vector<16x128xf32> to vector<2x8x128xf32>
    %cst_7 = arith.constant dense<0.000000e+00> : vector<8x128xf32>
    %13 = vector.multi_reduction <add>, %12, %cst_7 [0] : vector<2x8x128xf32> to vector<8x128xf32>
    %14 = arith.addf %11, %13 : vector<8x128xf32>
    %c0_8 = arith.constant 0 : index
    %c0_9 = arith.constant 0 : index
    %c0_10 = arith.constant 0 : index
    %c0_11 = arith.constant 0 : index
    %15 = vector.load %arg3[%c0_8, %c0_9, %c0_10, %c0_11] : memref<1x2x8x128xf32, #tpu.memory_space<vmem>>, vector<1x1x8x128xf32>
    %16 = vector.shape_cast %15 : vector<1x1x8x128xf32> to vector<8x128xf32>
    %17 = vector.shape_cast %14 : vector<8x128xf32> to vector<1x1x8x128xf32>
    tpu.vector_store %arg3[%c0_8, %c0_9, %c0_10, %c0_11], %17 {strides = array<i32>} : memref<1x2x8x128xf32, #tpu.memory_space<vmem>>, vector<1x1x8x128xf32>,
    %c0_12 = arith.constant 0 : index
    %c1 = arith.constant 1 : index
    %c0_13 = arith.constant 0 : index
    %c0_14 = arith.constant 0 : index
    %18 = vector.load %arg3[%c0_12, %c1, %c0_13, %c0_14] : memref<1x2x8x128xf32, #tpu.memory_space<vmem>>, vector<1x1x8x128xf32>
    %19 = vector.shape_cast %18 : vector<1x1x8x128xf32> to vector<8x128xf32>
    %20 = vector.shape_cast %9 : vector<16x128xf32> to vector<2x8x128xf32>
    %cst_15 = arith.constant dense<0.000000e+00> : vector<8x128xf32>
    %21 = vector.multi_reduction <add>, %20, %cst_15 [0] : vector<2x8x128xf32> to vector<8x128xf32>
    %22 = arith.addf %19, %21 : vector<8x128xf32>
    %c0_16 = arith.constant 0 : index
    %c1_17 = arith.constant 1 : index
    %c0_18 = arith.constant 0 : index
    %c0_19 = arith.constant 0 : index
    %23 = vector.load %arg3[%c0_16, %c1_17, %c0_18, %c0_19] : memref<1x2x8x128xf32, #tpu.memory_space<vmem>>, vector<1x1x8x128xf32>
    %24 = vector.shape_cast %23 : vector<1x1x8x128xf32> to vector<8x128xf32>
    %25 = vector.shape_cast %22 : vector<8x128xf32> to vector<1x1x8x128xf32>
    tpu.vector_store %arg3[%c0_16, %c1_17, %c0_18, %c0_19], %25 {strides = array<i32>} : memref<1x2x8x128xf32, #tpu.memory_space<vmem>>, vector<1x1x8x128xf32>,
    return
  }
  func.func @transform_0(%arg0: i32, %arg1: i32) -> (i32, i32) {
    %c1_i32 = arith.constant 1 : i32
    %0 = arith.muli %arg0, %c1_i32 : i32
    %1 = arith.addi %0, %arg1 : i32
    %c0_i32 = arith.constant 0 : i32
    %2 = arith.minsi %1, %c0_i32 : i32
    %c0_i32_0 = arith.constant 0 : i32
    %c0_i32_1 = arith.constant 0 : i32
    return %2, %c0_i32_0 : i32, i32
  }
  func.func @transform_1(%arg0: i32, %arg1: i32) -> (i32, i32, i32, i32) {
    %c0_i32 = arith.constant 0 : i32
    %c0_i32_0 = arith.constant 0 : i32
    %c0_i32_1 = arith.constant 0 : i32
    %c0_i32_2 = arith.constant 0 : i32
    return %arg0, %c0_i32, %c0_i32_0, %c0_i32_1 : i32, i32, i32, i32
  }
}

</mosaic_0001>

<llo_original>
// kernel: tpu_custom_call.1
$region0: #{tpu_custom_call.1}
  #allocation0 [shape = 'u32[]', space=smem, size = 0x4, offset = 0x4, fixed_abs, tag = 'smem constant byte address 0x4 - core index']
  #allocation1 [shape = 'u32[144,128]{1,0:T(1,128)}', space=vmem, size = 0x12000, scoped, tag = 'internal scratch']
  %s0 = inlined_call_operand.hbm [shape: f32[16,128], index: 0, kind: input, shape index: {}]
  %s1 = inlined_call_operand.hbm [shape: f32[1,2,8,128], index: 1, kind: output, shape index: {}]
  %s2 = sld [smem:[#allocation0]]
  $region22: #{tpu_custom_call.1} parent=0
    _
  %s4 = ssub.s32 1, %s2
  %s5 = scalar_select 0, %s4, %s2
  $region1: #{tpu_custom_call.1} parent=0
    #allocation2 [shape = 'u8[8192]{0}', space=vmem, size = 0x2000, scoped, tag = 'input window, operand 0, single buffered']
    #allocation3 [shape = 's32[1]{0}', space=sflag, size = 0x4, scoped, tag = 'scoped memory for tpu_custom_call.1']
    #allocation4 [shape = 's32[1]{0}', space=sflag, size = 0x4, scoped, tag = 'scoped memory for tpu_custom_call.1']
    #allocation5 [shape = 'u8[8192]{0}', space=vmem, size = 0x2000, scoped, tag = 'output window, operand 0, single buffered']
    %6 = vsyncpa [#allocation3], 0
    %7 = vsyncpa [#allocation4], 0
    // Predicated region
    $region2: #{tpu_custom_call.1} parent=1 // pred_check
      _
    $region3: #{tpu_custom_call.1} parent=1 // pred_check_branch
      %9 = sbr.rel (0) target = $region5
    $region4: #{tpu_custom_call.1} parent=1 // pred_region
      %s10 = sadd.s32 0, 0
      %p11 = scmp.lt.s32.totalorder %s10, 0
      %s12 = scalar_select %p11, %s10, 0
      %s13 = smul.u32 2, %s12
      %s15 = ssub.s32 256, 256
      %16 = vsyncadd [#allocation3], %s15
      %s17 = smul.addr %s13, 128
      %s18 = scalar_lea.hbm %s0, %s17
      %s19 = sshll.u32 [#allocation2], 4
      %s20 = int_to_ptr.vmem [resolvable:$true] %s19
      %25 = dma.hbm_to_vmem [thread:$0]  %s18, 256, %s20, [#allocation3], 128, 128, 8
    $region5: #{tpu_custom_call.1} parent=1 // pred_fallthru
      _
    // Predicated region
    $region6: #{tpu_custom_call.1} parent=1 // pred_check
      _
    $region7: #{tpu_custom_call.1} parent=1 // pred_check_branch
      %27 = sbr.rel (0) target = $region9
    $region8: #{tpu_custom_call.1} parent=1 // pred_region
      %28 = dma.done [#allocation3], 256
    $region9: #{tpu_custom_call.1} parent=1 // pred_fallthru
      _
    %s29 = sadd.s32 0, 0
    %p30 = scmp.lt.s32.totalorder %s29, 0
    %s31 = scalar_select %p30, %s29, 0
    %s32 = smul.u32 2, %s31
    %p33 = scmp.eq.s32.totalorder 0, 0
    // Predicated region
    $region10: #{tpu_custom_call.1} parent=1 // pred_check
      %p34 = pneg %p33
    $region11: #{tpu_custom_call.1} parent=1 // pred_check_branch
      %36 = sbr.rel (%p34) target = $region13
    $region12: #{tpu_custom_call.1} parent=1 // pred_region
      %37 = vst [vmem:[#allocation5] sm:$0xff] 0.0
      %38 = vst [vmem:[#allocation5 + $0x8] sm:$0xff] 0.0
    $region13: #{tpu_custom_call.1} parent=1 // pred_fallthru
      _
    %v39 = vld [vmem:[#allocation2] sm:$0xff]
    %v40 = vld [vmem:[#allocation2 + $0x8] sm:$0xff]
    %v41 = vsub.f32 %v39, 0.5
    %v42 = vsub.f32 %v40, 0.5
    %v43 = vadd.f32 %v39, 0.5
    %v44 = vadd.f32 %v40, 0.5
    %v45 = vmul.f32 %v41, %v41
    %v46 = vmul.f32 %v42, %v42
    %v47 = vmul.f32 %v43, %v43
    %v48 = vmul.f32 %v44, %v44
    %v49 = vld [vmem:[#allocation5] sm:$0xff]
    %v50 = vadd.f32 %v45, %v46
    %v51 = vadd.f32 %v49, %v50
    %52 = vst [vmem:[#allocation5] sm:$0xff] %v51
    %s53 = scalar_lea.vmem [#allocation5], 8
    %v54 = vld [vmem:[%s53] sm:$0xff]
    %v55 = vadd.f32 %v47, %v48
    %v56 = vadd.f32 %v54, %v55
    %57 = vst [vmem:[%s53] sm:$0xff] %v56
    // Predicated region
    $region14: #{tpu_custom_call.1} parent=1 // pred_check
      _
    $region15: #{tpu_custom_call.1} parent=1 // pred_check_branch
      %59 = sbr.rel (0) target = $region17
    $region16: #{tpu_custom_call.1} parent=1 // pred_region
      %s61 = ssub.s32 256, 256
      %62 = vsyncadd [#allocation4], %s61
      %s63 = sshll.u32 [#allocation5], 4
      %s64 = int_to_ptr.vmem [resolvable:$true] %s63
      %69 = dma.vmem_to_hbm [thread:$0]  %s64, 256, %s1, [#allocation4], 128, 128, 8
    $region17: #{tpu_custom_call.1} parent=1 // pred_fallthru
      _
    // Predicated region
    $region18: #{tpu_custom_call.1} parent=1 // pred_check
      _
    $region19: #{tpu_custom_call.1} parent=1 // pred_check_branch
      %71 = sbr.rel (0) target = $region21
    $region20: #{tpu_custom_call.1} parent=1 // pred_region
      %72 = dma.done [#allocation4], 256
    $region21: #{tpu_custom_call.1} parent=1 // pred_fallthru
      _
    %73 = vsyncpa [#allocation3], 1
    %74 = vsyncpa [#allocation4], 1

</llo_original>
